<compile_context>
chip_gen: v5e
topology: v5e:2x2
jax: 0.10.0
libtpu: 0.0.40
codegen_flags: <defaults>
</compile_context>

<pallas_src>
from functools import partial

import jax
import jax.numpy as jnp
from jax.experimental import pallas as pl
from jax.experimental.pallas import tpu as pltpu


def _round_up(x, m):
    return ((x + m - 1) // m) * m


def _anomaly_loss_kernel(sim_ref, lab_ref, out_ref, acc_ref, *,
                         margin, inv_k, n_lane_chunks):
    k = pl.program_id(1)

    @pl.when(k == 0)
    def _init():
        acc_ref[...] = jnp.zeros_like(acc_ref)

    # Lane-dense partial sums over this K tile: pure VPU adds of 128-wide
    # chunks, upcasting each bf16/f32 chunk to f32 as it is loaded.
    partial_sum = sim_ref[:, 0:128].astype(jnp.float32)
    for j in range(1, n_lane_chunks):
        partial_sum = partial_sum + sim_ref[:, j * 128:(j + 1) * 128].astype(jnp.float32)
    acc_ref[...] += partial_sum

    # Epilogue once per N-block (last K step): one cross-lane reduce, mask /
    # hinge math, per-block partials written as a lane-dense (1, 8, 128) block.
    @pl.when(k == pl.num_programs(1) - 1)
    def _finalize():
        labs = lab_ref[...]                                            # (N_blk, 1) i32
        row_mean = jnp.sum(acc_ref[...], axis=1, keepdims=True) * inv_k  # (N_blk, 1) f32

        normal_mask = labs == 1
        anomaly_mask = labs == 0         # padded rows carry label -1 -> excluded

        # hinge_embedding_loss, target=+1: x ; target=-1: max(0, margin - x)
        n_sum = jnp.sum(jnp.where(normal_mask, row_mean, 0.0))
        a_sum = jnp.sum(jnp.where(anomaly_mask,
                                  jnp.maximum(margin - row_mean, 0.0), 0.0))
        n_cnt = jnp.sum(normal_mask.astype(jnp.float32))
        a_cnt = jnp.sum(anomaly_mask.astype(jnp.float32))

        row = jax.lax.broadcasted_iota(jnp.int32, out_ref.shape, 1)
        out_ref[...] = jnp.where(
            row == 0, n_sum,
            jnp.where(row == 1, a_sum,
                      jnp.where(row == 2, n_cnt,
                                jnp.where(row == 3, a_cnt, 0.0))))


def anomaly_aware_loss(similarities, labels, margin=1.0):
    """Pallas TPU implementation of AnomalyAwareLoss.forward."""
    similarities = jnp.asarray(similarities)
    if similarities.dtype not in (jnp.dtype(jnp.bfloat16), jnp.dtype(jnp.float32)):
        similarities = similarities.astype(jnp.float32)
    labels = jnp.asarray(labels).astype(jnp.int32)
    N, K = similarities.shape

    # --- tile selection (v7x-safe: <= 2 MiB f32 sims tile, 2x double-buffered) ---
    K_blk = min(_round_up(K, 128), 2048)
    target_elems = 512 * 1024                                   # ~2 MiB of f32
    n_blk_cap = max(256, _round_up(max(target_elems // K_blk, 8), 8))
    N_blk = min(_round_up(N, 8), n_blk_cap)

    N_pad = _round_up(N, N_blk)
    K_pad = _round_up(K, K_blk)

    sims_p = similarities
    if (N_pad, K_pad) != (N, K):
        sims_p = jnp.pad(similarities, ((0, N_pad - N), (0, K_pad - K)))
    labs_p = jnp.pad(labels, (0, N_pad - N), constant_values=-1).reshape(N_pad, 1)

    grid = (N_pad // N_blk, K_pad // K_blk)
    n_lane_chunks = K_blk // 128

    partials = pl.pallas_call(
        partial(_anomaly_loss_kernel,
                margin=float(margin),
                inv_k=1.0 / float(K),
                n_lane_chunks=n_lane_chunks),
        out_shape=jax.ShapeDtypeStruct((grid[0], 8, 128), jnp.float32),
        grid_spec=pltpu.PrefetchScalarGridSpec(
            num_scalar_prefetch=0,
            grid=grid,
            in_specs=[
                pl.BlockSpec((N_blk, K_blk), lambda i, k: (i, k)),
                pl.BlockSpec((N_blk, 1), lambda i, k: (i, 0)),
            ],
            out_specs=pl.BlockSpec((1, 8, 128), lambda i, k: (i, 0, 0)),
            scratch_shapes=[pltpu.VMEM((N_blk, 128), jnp.float32)],
        ),
        compiler_params=pltpu.CompilerParams(
            dimension_semantics=("parallel", "arbitrary")),
    )(sims_p, labs_p)

    # Finalization (counts, divides, empty-group guards) in plain JAX:
    # replicates the `if mask.any():` guards of the torch module.
    n_sum = jnp.sum(partials[:, 0, 0])
    a_sum = jnp.sum(partials[:, 1, 0])
    n_cnt = jnp.sum(partials[:, 2, 0])
    a_cnt = jnp.sum(partials[:, 3, 0])

    normal_loss = jnp.where(n_cnt > 0.0, n_sum / jnp.maximum(n_cnt, 1.0), 0.0)
    anomaly_loss = jnp.where(a_cnt > 0.0, a_sum / jnp.maximum(a_cnt, 1.0), 0.0)
    return normal_loss + anomaly_loss


def _reference(similarities, labels, margin=1.0):
    """Plain-JAX reference mirroring the torch forward."""
    sims = jnp.asarray(similarities).astype(jnp.float32)
    row_mean = jnp.mean(sims, axis=1)
    normal = labels == 1
    anomaly = labels == 0
    loss = jnp.float32(0.0)
    if bool(jnp.any(normal)):
        loss = loss + jnp.mean(row_mean[normal])
    if bool(jnp.any(anomaly)):
        loss = loss + jnp.mean(jnp.maximum(margin - row_mean[anomaly], 0.0))
    return loss


if __name__ == "__main__":
    key = jax.random.PRNGKey(0)
    k1, k2, k3, k4 = jax.random.split(key, 4)

    # Test 1: small aligned shape, f32, mixed labels.
    N, K = 8, 128
    sims = jax.random.normal(k1, (N, K), dtype=jnp.float32)
    labels = jax.random.bernoulli(k2, 0.5, (N,)).astype(jnp.int32)
    out = jax.block_until_ready(anomaly_aware_loss(sims, labels, margin=1.0))
    ref = _reference(sims, labels, margin=1.0)
    assert jnp.allclose(out, ref, atol=1e-5, rtol=1e-5), (out, ref)

    # Test 2: unaligned N and K (exercises padding + masked counts), f32.
    N, K = 10, 200
    sims2 = jax.random.normal(k3, (N, K), dtype=jnp.float32)
    labels2 = jax.random.bernoulli(k4, 0.5, (N,)).astype(jnp.int32)
    out = jax.block_until_ready(anomaly_aware_loss(sims2, labels2, margin=1.0))
    ref = _reference(sims2, labels2, margin=1.0)
    assert jnp.allclose(out, ref, atol=1e-5, rtol=1e-5), (out, ref)

    # Test 3: single-class labels (empty anomaly group -> guard path).
    labels_all_normal = jnp.ones((N,), dtype=jnp.int32)
    out = jax.block_until_ready(anomaly_aware_loss(sims2, labels_all_normal, margin=1.0))
    ref = _reference(sims2, labels_all_normal, margin=1.0)
    assert jnp.allclose(out, ref, atol=1e-5, rtol=1e-5), (out, ref)

    # Test 4: bf16 storage (half the HBM traffic), f32 accumulation in-kernel.
    sims_bf16 = sims.astype(jnp.bfloat16)
    out = jax.block_until_ready(anomaly_aware_loss(sims_bf16, labels, margin=1.0))
    ref = _reference(sims_bf16, labels, margin=1.0)
    assert jnp.allclose(out, ref, atol=1e-3, rtol=1e-3), (out, ref)

    print("KERNEL_OK")
</pallas_src>

<mosaic_0001>
module attributes {stable_mosaic.version = 11 : i64} {
  func.func @_anomaly_loss_kernel(%arg0: i32, %arg1: i32, %arg2: memref<8x128xf32, #tpu.memory_space<vmem>>, %arg3: memref<8x1xi32, #tpu.memory_space<vmem>>, %arg4: memref<1x8x128xf32, #tpu.memory_space<vmem>>, %arg5: memref<8x128xf32, #tpu.memory_space<vmem>>) attributes {dimension_semantics = [#tpu.dimension_semantics<parallel>, #tpu.dimension_semantics<arbitrary>], iteration_bounds = array<i64: 1, 1>, scalar_prefetch = 0 : i64, scratch_operands = 1 : i64, tpu.core_type = #tpu.core_type<tc>, window_params = [{transform_indices = @transform_0, window_bounds = array<i64: 8, 128>}, {transform_indices = @transform_1, window_bounds = array<i64: 8, 1>}, {transform_indices = @transform_2, window_bounds = array<i64: 1, 8, 128>}]} {
    %c0_i32 = arith.constant 0 : i32
    %0 = arith.cmpi eq, %arg1, %c0_i32 : i32
    %1 = arith.extui %0 : i1 to i32
    %c0_i32_0 = arith.constant 0 : i32
    %2 = arith.cmpi ne, %1, %c0_i32_0 : i32
    scf.if %2 {
      %cst = arith.constant 0.000000e+00 : f32
      %10 = vector.broadcast %cst : f32 to vector<8x128xf32>
      %c0_8 = arith.constant 0 : index
      %c0_9 = arith.constant 0 : index
      %11 = vector.load %arg5[%c0_8, %c0_9] : memref<8x128xf32, #tpu.memory_space<vmem>>, vector<8x128xf32>
      tpu.vector_store %arg5[%c0_8, %c0_9], %10 {strides = array<i32>} : memref<8x128xf32, #tpu.memory_space<vmem>>, vector<8x128xf32>,
    } else {
    }
    %c0 = arith.constant 0 : index
    %c0_1 = arith.constant 0 : index
    %3 = vector.load %arg2[%c0, %c0_1] : memref<8x128xf32, #tpu.memory_space<vmem>>, vector<8x128xf32>
    %c0_2 = arith.constant 0 : index
    %c0_3 = arith.constant 0 : index
    %4 = vector.load %arg5[%c0_2, %c0_3] : memref<8x128xf32, #tpu.memory_space<vmem>>, vector<8x128xf32>
    %5 = arith.addf %4, %3 : vector<8x128xf32>
    %c0_4 = arith.constant 0 : index
    %c0_5 = arith.constant 0 : index
    %6 = vector.load %arg5[%c0_4, %c0_5] : memref<8x128xf32, #tpu.memory_space<vmem>>, vector<8x128xf32>
    tpu.vector_store %arg5[%c0_4, %c0_5], %5 {strides = array<i32>} : memref<8x128xf32, #tpu.memory_space<vmem>>, vector<8x128xf32>,
    %c0_i32_6 = arith.constant 0 : i32
    %7 = arith.cmpi eq, %arg1, %c0_i32_6 : i32
    %8 = arith.extui %7 : i1 to i32
    %c0_i32_7 = arith.constant 0 : i32
    %9 = arith.cmpi ne, %8, %c0_i32_7 : i32
    scf.if %9 {
      %c0_8 = arith.constant 0 : index
      %c0_9 = arith.constant 0 : index
      %10 = vector.load %arg3[%c0_8, %c0_9] : memref<8x1xi32, #tpu.memory_space<vmem>>, vector<8x1xi32>
      %c0_10 = arith.constant 0 : index
      %c0_11 = arith.constant 0 : index
      %11 = vector.load %arg5[%c0_10, %c0_11] : memref<8x128xf32, #tpu.memory_space<vmem>>, vector<8x128xf32>
      %cst = arith.constant dense<0.000000e+00> : vector<8xf32>
      %12 = vector.multi_reduction <add>, %11, %cst [1] : vector<8x128xf32> to vector<8xf32>
      %13 = vector.shape_cast %12 : vector<8xf32> to vector<8x1xf32>
      %cst_12 = arith.constant 7.812500e-03 : f32
      %14 = vector.broadcast %cst_12 : f32 to vector<8x1xf32>
      %15 = arith.mulf %13, %14 : vector<8x1xf32>
      %c1_i32 = arith.constant 1 : i32
      %16 = vector.broadcast %c1_i32 : i32 to vector<8x1xi32>
      %17 = arith.cmpi eq, %10, %16 : vector<8x1xi32>
      %c0_i32_13 = arith.constant 0 : i32
      %18 = vector.broadcast %c0_i32_13 : i32 to vector<8x1xi32>
      %19 = arith.cmpi eq, %10, %18 : vector<8x1xi32>
      %cst_14 = arith.constant 0.000000e+00 : f32
      %20 = vector.broadcast %cst_14 : f32 to vector<8x1xf32>
      %21 = arith.select %17, %15, %20 : vector<8x1xi1>, vector<8x1xf32>
      %22 = vector.shape_cast %21 : vector<8x1xf32> to vector<1x8x1xf32>
      %cst_15 = arith.constant dense<0.000000e+00> : vector<1xf32>
      %23 = vector.multi_reduction <add>, %22, %cst_15 [1, 2] : vector<1x8x1xf32> to vector<1xf32>
      %24 = vector.shape_cast %23 : vector<1xf32> to vector<1x1x1xf32>
      %25 = vector.extract %24[0, 0, 0] : f32 from vector<1x1x1xf32>
      %cst_16 = arith.constant 1.000000e+00 : f32
      %26 = vector.broadcast %cst_16 : f32 to vector<8x1xf32>
      %27 = arith.subf %26, %15 : vector<8x1xf32>
      %cst_17 = arith.constant 0.000000e+00 : f32
      %28 = vector.broadcast %cst_17 : f32 to vector<8x1xf32>
      %29 = arith.maximumf %27, %28 : vector<8x1xf32>
      %cst_18 = arith.constant 0.000000e+00 : f32
      %30 = vector.broadcast %cst_18 : f32 to vector<8x1xf32>
      %31 = arith.select %19, %29, %30 : vector<8x1xi1>, vector<8x1xf32>
      %32 = vector.shape_cast %31 : vector<8x1xf32> to vector<1x8x1xf32>
      %cst_19 = arith.constant dense<0.000000e+00> : vector<1xf32>
      %33 = vector.multi_reduction <add>, %32, %cst_19 [1, 2] : vector<1x8x1xf32> to vector<1xf32>
      %34 = vector.shape_cast %33 : vector<1xf32> to vector<1x1x1xf32>
      %35 = vector.extract %34[0, 0, 0] : f32 from vector<1x1x1xf32>
      %36 = arith.extui %17 : vector<8x1xi1> to vector<8x1xi32>
      %37 = arith.sitofp %36 : vector<8x1xi32> to vector<8x1xf32>
      %38 = vector.shape_cast %37 : vector<8x1xf32> to vector<1x8x1xf32>
      %cst_20 = arith.constant dense<0.000000e+00> : vector<1xf32>
      %39 = vector.multi_reduction <add>, %38, %cst_20 [1, 2] : vector<1x8x1xf32> to vector<1xf32>
      %40 = vector.shape_cast %39 : vector<1xf32> to vector<1x1x1xf32>
      %41 = vector.extract %40[0, 0, 0] : f32 from vector<1x1x1xf32>
      %42 = arith.extui %19 : vector<8x1xi1> to vector<8x1xi32>
      %43 = arith.sitofp %42 : vector<8x1xi32> to vector<8x1xf32>
      %44 = vector.shape_cast %43 : vector<8x1xf32> to vector<1x8x1xf32>
      %cst_21 = arith.constant dense<0.000000e+00> : vector<1xf32>
      %45 = vector.multi_reduction <add>, %44, %cst_21 [1, 2] : vector<1x8x1xf32> to vector<1xf32>
      %46 = vector.shape_cast %45 : vector<1xf32> to vector<1x1x1xf32>
      %47 = vector.extract %46[0, 0, 0] : f32 from vector<1x1x1xf32>
      %48 = tpu.iota {dimensions = array<i32: 1>} : vector<1x8x128xi32>
      %c0_i32_22 = arith.constant 0 : i32
      %49 = vector.broadcast %c0_i32_22 : i32 to vector<1x8x128xi32>
      %50 = arith.cmpi eq, %48, %49 : vector<1x8x128xi32>
      %c1_i32_23 = arith.constant 1 : i32
      %51 = vector.broadcast %c1_i32_23 : i32 to vector<1x8x128xi32>
      %52 = arith.cmpi eq, %48, %51 : vector<1x8x128xi32>
      %c2_i32 = arith.constant 2 : i32
      %53 = vector.broadcast %c2_i32 : i32 to vector<1x8x128xi32>
      %54 = arith.cmpi eq, %48, %53 : vector<1x8x128xi32>
      %c3_i32 = arith.constant 3 : i32
      %55 = vector.broadcast %c3_i32 : i32 to vector<1x8x128xi32>
      %56 = arith.cmpi eq, %48, %55 : vector<1x8x128xi32>
      %cst_24 = arith.constant 0.000000e+00 : f32
      %57 = vector.broadcast %47 : f32 to vector<1x8x128xf32>
      %58 = vector.broadcast %cst_24 : f32 to vector<1x8x128xf32>
      %59 = arith.select %56, %57, %58 : vector<1x8x128xi1>, vector<1x8x128xf32>
      %60 = vector.broadcast %41 : f32 to vector<1x8x128xf32>
      %61 = arith.select %54, %60, %59 : vector<1x8x128xi1>, vector<1x8x128xf32>
      %62 = vector.broadcast %35 : f32 to vector<1x8x128xf32>
      %63 = arith.select %52, %62, %61 : vector<1x8x128xi1>, vector<1x8x128xf32>
      %64 = vector.broadcast %25 : f32 to vector<1x8x128xf32>
      %65 = arith.select %50, %64, %63 : vector<1x8x128xi1>, vector<1x8x128xf32>
      %c0_25 = arith.constant 0 : index
      %c0_26 = arith.constant 0 : index
      %c0_27 = arith.constant 0 : index
      %66 = vector.load %arg4[%c0_25, %c0_26, %c0_27] : memref<1x8x128xf32, #tpu.memory_space<vmem>>, vector<1x8x128xf32>
      tpu.vector_store %arg4[%c0_25, %c0_26, %c0_27], %65 {strides = array<i32>} : memref<1x8x128xf32, #tpu.memory_space<vmem>>, vector<1x8x128xf32>,
    } else {
    }
    return
  }
  func.func @transform_0(%arg0: i32, %arg1: i32) -> (i32, i32) {
    %c0_i32 = arith.constant 0 : i32
    return %arg0, %arg1 : i32, i32
  }
  func.func @transform_1(%arg0: i32, %arg1: i32) -> (i32, i32) {
    %c0_i32 = arith.constant 0 : i32
    %c0_i32_0 = arith.constant 0 : i32
    return %arg0, %c0_i32 : i32, i32
  }
  func.func @transform_2(%arg0: i32, %arg1: i32) -> (i32, i32, i32) {
    %c0_i32 = arith.constant 0 : i32
    %c0_i32_0 = arith.constant 0 : i32
    %c0_i32_1 = arith.constant 0 : i32
    return %arg0, %c0_i32, %c0_i32_0 : i32, i32, i32
  }
}

</mosaic_0001>

<llo_original>
// kernel: tpu_custom_call.1
$region0: #{tpu_custom_call.1}
  #allocation0 [shape = 'u32[]', space=smem, size = 0x4, offset = 0x4, fixed_abs, tag = 'smem constant byte address 0x4 - core index']
  #allocation1 [shape = 'u32[72,128]{1,0:T(1,128)}', space=vmem, size = 0x9000, scoped, tag = 'internal scratch']
  #allocation2 [shape = 'f32[8,128]{1,0:T(8,128)}', space=vmem, size = 0x1000, scoped, tag = 'scratch operand']
  %s0 = inlined_call_operand.vmem [shape: f32[8,128], index: 0, kind: input, shape index: {}]
  %s1 = inlined_call_operand.vmem [shape: s32[8,1], index: 1, kind: input, shape index: {}]
  %s2 = inlined_call_operand.hbm [shape: f32[1,8,128], index: 2, kind: output, shape index: {}]
  %s3 = sld [smem:[#allocation0]]
  $region26: #{tpu_custom_call.1} parent=0
    _
  %s5 = ssub.s32 1, %s3
  %s6 = scalar_select 0, %s5, %s3
  $region1: #{tpu_custom_call.1} parent=0
    #allocation3 [shape = 'u8[4096]{0}', space=vmem, size = 0x1000, scoped, tag = 'output window, operand 0, single buffered']
    #allocation4 [shape = 's32[1]{0}', space=sflag, size = 0x4, scoped, tag = 'scoped memory for tpu_custom_call.1']
    %7 = vsyncpa [#allocation4], 0
    // Predicated region
    $region2: #{tpu_custom_call.1} parent=1 // pred_check
      _
    $region3: #{tpu_custom_call.1} parent=1 // pred_check_branch
      %9 = sbr.rel (0) target = $region5
    $region4: #{tpu_custom_call.1} parent=1 // pred_region
      _
    $region5: #{tpu_custom_call.1} parent=1 // pred_fallthru
      _
    // Predicated region
    $region6: #{tpu_custom_call.1} parent=1 // pred_check
      _
    $region7: #{tpu_custom_call.1} parent=1 // pred_check_branch
      %11 = sbr.rel (0) target = $region9
    $region8: #{tpu_custom_call.1} parent=1 // pred_region
      _
    $region9: #{tpu_custom_call.1} parent=1 // pred_fallthru
      _
    %p12 = scmp.eq.s32.totalorder 0, 0
    // Predicated region
    $region10: #{tpu_custom_call.1} parent=1 // pred_check
      %p13 = pneg %p12
    $region11: #{tpu_custom_call.1} parent=1 // pred_check_branch
      %15 = sbr.rel (%p13) target = $region13
    $region12: #{tpu_custom_call.1} parent=1 // pred_region
      %16 = vst [vmem:[#allocation2] sm:$0xff] 0.0
    $region13: #{tpu_custom_call.1} parent=1 // pred_fallthru
      _
    %v17 = vld [vmem:[%s0] sm:$0xff]
    %v18 = vld [vmem:[#allocation2] sm:$0xff]
    %v19 = vadd.f32 %v18, %v17
    %20 = vst [vmem:[#allocation2] sm:$0xff] %v19
    // Predicated region
    $region14: #{tpu_custom_call.1} parent=1 // pred_check
      %p21 = pneg %p12
    $region15: #{tpu_custom_call.1} parent=1 // pred_check_branch
      %23 = sbr.rel (%p21) target = $region17
    $region16: #{tpu_custom_call.1} parent=1 // pred_region
      %v24 = vld [vmem:[%s1] sm:$0xff]
      %v25 = vld [vmem:[#allocation2] sm:$0xff]
      %26 = vadd.xlane.f32.xlu0 %v25
      %v27 = vpop.xlane.xlu0 %26
      %v28 = vmul.f32 %v27, 0.0078125
      %vm29 = vcmp.eq.s32.totalorder %v24, 1
      %vm30 = vcmp.eq.s32.totalorder %v24, 0
      %v31 = vsel %vm29, %v28, 0.0
      %vm32 = vcmask 7168
      %v33 = vsel %vm32, %v31, 0.0
      %34 = vadd.xlane.f32.xlu0 %v33
      %v35 = vpop.xlane.xlu0 %34
      %v36 = vrot.slane %v35, 4
      %v37 = vadd.f32 %v35, %v36
      %v38 = vrot.slane %v37, 2
      %v39 = vadd.f32 %v37, %v38
      %v40 = vrot.slane %v39, 1
      %v41 = vadd.f32 %v39, %v40
      %s42 = vtos %v41
      %v43 = vsub.f32 1.0, %v28
      %v44 = vmax.f32 %v43, 0.0
      %v45 = vsel %vm30, %v44, 0.0
      %v46 = vsel %vm32, %v45, 0.0
      %47 = vadd.xlane.f32.xlu0 %v46
      %v48 = vpop.xlane.xlu0 %47
      %v49 = vrot.slane %v48, 4
      %v50 = vadd.f32 %v48, %v49
      %v51 = vrot.slane %v50, 2
      %v52 = vadd.f32 %v50, %v51
      %v53 = vrot.slane %v52, 1
      %v54 = vadd.f32 %v52, %v53
      %s55 = vtos %v54
      %v56 = vsel %vm29, 1, 0
      %v57 = vcvt.s32.f32 %v56
      %v58 = vsel %vm32, %v57, 0.0
      %59 = vadd.xlane.f32.xlu0 %v58
      %v60 = vpop.xlane.xlu0 %59
      %v61 = vrot.slane %v60, 4
      %v62 = vadd.f32 %v60, %v61
      %v63 = vrot.slane %v62, 2
      %v64 = vadd.f32 %v62, %v63
      %v65 = vrot.slane %v64, 1
      %v66 = vadd.f32 %v64, %v65
      %s67 = vtos %v66
      %v68 = vsel %vm30, 1, 0
      %v69 = vcvt.s32.f32 %v68
      %v70 = vsel %vm32, %v69, 0.0
      %71 = vadd.xlane.f32.xlu0 %v70
      %v72 = vpop.xlane.xlu0 %71
      %v73 = vrot.slane %v72, 4
      %v74 = vadd.f32 %v72, %v73
      %v75 = vrot.slane %v74, 2
      %v76 = vadd.f32 %v74, %v75
      %v77 = vrot.slane %v76, 1
      %v78 = vadd.f32 %v76, %v77
      %s79 = vtos %v78
      %v80 = vlaneseq
      %v81 = vshrl.u32 %v80, 7
      %vm82 = vcmp.eq.s32.totalorder %v81, 0
      %vm83 = vcmp.eq.s32.totalorder %v81, 1
      %vm84 = vcmp.eq.s32.totalorder %v81, 2
      %vm85 = vcmp.eq.s32.totalorder %v81, 3
      %v86 = vstv %s79
      %v87 = vsel %vm85, %v86, 0.0
      %v88 = vstv %s67
      %v89 = vsel %vm84, %v88, %v87
      %v90 = vstv %s55
      %v91 = vsel %vm83, %v90, %v89
      %v92 = vstv %s42
      %v93 = vsel %vm82, %v92, %v91
      %94 = vst [vmem:[#allocation3] sm:$0xff] %v93
    $region17: #{tpu_custom_call.1} parent=1 // pred_fallthru
      _
    // Predicated region
    $region18: #{tpu_custom_call.1} parent=1 // pred_check
      _
    $region19: #{tpu_custom_call.1} parent=1 // pred_check_branch
      %96 = sbr.rel (0) target = $region21
    $region20: #{tpu_custom_call.1} parent=1 // pred_region
      %98 = vsyncadd [#allocation4], 0
      %s100 = sshll.u32 [#allocation3], 4
      %s101 = int_to_ptr.vmem [resolvable:$true] %s100
      %s102 = sshll.u32 %s2, 4
      %s103 = int_to_ptr.hbm [resolvable:$true] %s102
      %105 = dma.vmem_to_hbm [thread:$0]  %s101, 128, %s103, [#allocation4]
    $region21: #{tpu_custom_call.1} parent=1 // pred_fallthru
      _
    // Predicated region
    $region22: #{tpu_custom_call.1} parent=1 // pred_check
      _
    $region23: #{tpu_custom_call.1} parent=1 // pred_check_branch
      %107 = sbr.rel (0) target = $region25
    $region24: #{tpu_custom_call.1} parent=1 // pred_region
      %109 = dma.done [#allocation4], 128
    $region25: #{tpu_custom_call.1} parent=1 // pred_fallthru
      _
    %110 = vsyncpa [#allocation4], 1

</llo_original>
